<compile_context>
chip_gen: v6e
topology: v6e:2x2x1
jax: 0.10.0
libtpu: 0.0.40
codegen_flags: <defaults>
</compile_context>

<pallas_src>
import functools

import jax
import jax.numpy as jnp
from jax import lax
from jax.experimental import pallas as pl
from jax.experimental.pallas import tpu as pltpu

_LANE = 128


def gadropout_kernel(seed_ref, x_ref, thresh_ref, o_ref, *, num_features):
    tb, fp = x_ref.shape

    # ---- stateless per-element random bits (lowbias32 hash of flat index) ----
    rows = lax.broadcasted_iota(jnp.int32, (tb, fp), 0) + pl.program_id(0) * tb
    cols = lax.broadcasted_iota(jnp.int32, (tb, fp), 1)
    # Mix the call seed in (golden-ratio odd constant; int32 wraps like uint32).
    seed_mix = seed_ref[0] * jnp.int32(-1640531527)          # 0x9E3779B9
    h = ((rows * fp + cols) ^ seed_mix).astype(jnp.uint32)
    h = (h ^ (h >> 16)) * jnp.uint32(0x7FEB352D)
    h = (h ^ (h >> 15)) * jnp.uint32(0x846CA68B)
    h = h ^ (h >> 16)
    r = (h >> 8).astype(jnp.int32)                            # uniform in [0, 2^24)

    # ---- Bernoulli keep mask in the integer domain ----
    # keep  <=>  r < floor(gene * 2^24); padded columns have thresh == 0.
    keep = r < thresh_ref[...]                                # (tb, fp) bool

    # ---- per-row rescale: num_features / cnt, -1 where cnt == 0 ----
    cnt = jnp.sum(keep.astype(jnp.float32), axis=1, keepdims=True)  # (tb, 1)
    scale = jnp.where(cnt == 0.0,
                      jnp.float32(-1.0),
                      jnp.float32(num_features) / cnt)

    o_ref[...] = jnp.where(keep, x_ref[...] * scale,
                           jnp.float32(0.0)).astype(o_ref.dtype)


def _choose_tb(batch, fp, itemsize, target_block_bytes=4 << 20):
    """Largest batch tile (multiple of 8) with an x tile <= ~4 MiB."""
    tb = max(8, (target_block_bytes // (fp * itemsize)) // 8 * 8)
    tb = min(tb, 1024)
    b_pad = ((batch + 7) // 8) * 8
    return max(8, min(tb, b_pad))


def gadropout_forward(x, gene, seed, *, training=True, tb=None):
    """GADropout forward. x: (B, F), gene: (F,) per-feature keep probabilities."""
    if not training:
        return x

    x = jnp.asarray(x)
    gene = jnp.asarray(gene, dtype=jnp.float32)
    B, F = x.shape
    assert gene.shape == (F,)

    # Lane-dense feature axis: pad F up to a multiple of 128. Padded gene
    # columns get probability 0.0 -> never kept -> cnt and output unaffected.
    Fp = ((F + _LANE - 1) // _LANE) * _LANE
    if Fp != F:
        x_p = jnp.pad(x, ((0, 0), (0, Fp - F)))
        gene_p = jnp.pad(gene, (0, Fp - F))
    else:
        x_p, gene_p = x, gene

    # Integer threshold for the Bernoulli compare.
    thresh = jnp.floor(gene_p * jnp.float32(1 << 24)).astype(jnp.int32).reshape(1, Fp)
    seed_arr = jnp.asarray([seed], dtype=jnp.int32)

    itemsize = x.dtype.itemsize
    if tb is None:
        tb = _choose_tb(B, Fp, itemsize)
    grid = (pl.cdiv(B, tb),)

    block_bytes = tb * Fp * itemsize
    vmem_limit = int(min(max(6 * block_bytes, 16 << 20), 48 << 20))

    cost = pl.CostEstimate(
        flops=int(8 * B * Fp),
        transcendentals=0,
        bytes_accessed=int(2 * B * Fp * itemsize + Fp * 4),
    )

    kernel = functools.partial(gadropout_kernel, num_features=F)

    out_p = pl.pallas_call(
        kernel,
        out_shape=jax.ShapeDtypeStruct((B, Fp), x.dtype),
        grid_spec=pltpu.PrefetchScalarGridSpec(
            num_scalar_prefetch=1,
            grid=grid,
            in_specs=[
                pl.BlockSpec((tb, Fp), lambda i, seed: (i, 0)),  # x tile
                pl.BlockSpec((1, Fp), lambda i, seed: (0, 0)),   # thresholds (replicated)
            ],
            out_specs=pl.BlockSpec((tb, Fp), lambda i, seed: (i, 0)),
        ),
        compiler_params=pltpu.CompilerParams(
            dimension_semantics=("parallel",),   # blocks are fully independent
            vmem_limit_bytes=vmem_limit,
        ),
        cost_estimate=cost,
    )(seed_arr, x_p, thresh)

    return out_p[:, :F] if Fp != F else out_p


if __name__ == "__main__":
    key = jax.random.PRNGKey(0)
    (kx,) = jax.random.split(key, 1)

    B, F = 8, 32  # num_features = 32
    x = jax.random.normal(kx, (B, F), dtype=jnp.float32)
    # Deterministic "gene" (per-feature keep probabilities) in [0.1, 0.9].
    gene = jnp.linspace(0.1, 0.9, F, dtype=jnp.float32)

    out = gadropout_forward(x, gene, seed=1234, training=True)
    out = jax.block_until_ready(out)

    # Sanity checks on semantics.
    assert out.shape == x.shape and out.dtype == x.dtype
    # Kept elements are x scaled by a positive factor; dropped elements are 0.
    kept = out != 0.0
    assert bool(jnp.all(jnp.sign(out[kept]) == jnp.sign(x[kept])))
    # Eval mode is identity.
    out_eval = gadropout_forward(x, gene, seed=1234, training=False)
    assert bool(jnp.allclose(out_eval, x))

    print("KERNEL_OK")
</pallas_src>

<mosaic_0001>
module attributes {stable_mosaic.version = 11 : i64} {
  func.func @gadropout_kernel(%arg0: i32, %arg1: memref<1xi32, #tpu.memory_space<smem>>, %arg2: memref<8x128xf32, #tpu.memory_space<vmem>>, %arg3: memref<1x128xi32, #tpu.memory_space<vmem>>, %arg4: memref<8x128xf32, #tpu.memory_space<vmem>>) attributes {dimension_semantics = [#tpu.dimension_semantics<parallel>], iteration_bounds = array<i64: 1>, scalar_prefetch = 1 : i64, scratch_operands = 0 : i64, tpu.core_type = #tpu.core_type<tc>, window_params = [{transform_indices = @transform_0, window_bounds = array<i64: 8, 128>}, {pipeline_mode = #tpu.pipeline_mode<synchronous>, transform_indices = @transform_1, window_bounds = array<i64: 1, 128>}, {transform_indices = @transform_2, window_bounds = array<i64: 8, 128>}]} {
    %0 = tpu.iota {dimensions = array<i32: 0>} : vector<8x128xi32>
    %c8_i32 = arith.constant 8 : i32
    %1 = arith.muli %arg0, %c8_i32 : i32
    %2 = vector.broadcast %1 : i32 to vector<8x128xi32>
    %3 = arith.addi %0, %2 : vector<8x128xi32>
    %4 = tpu.iota {dimensions = array<i32: 1>} : vector<8x128xi32>
    %c0 = arith.constant 0 : index
    %5 = memref.load %arg1[%c0] : memref<1xi32, #tpu.memory_space<smem>>
    %c-1640531527_i32 = arith.constant -1640531527 : i32
    %6 = arith.muli %5, %c-1640531527_i32 : i32
    %c128_i32 = arith.constant 128 : i32
    %7 = vector.broadcast %c128_i32 : i32 to vector<8x128xi32>
    %8 = arith.muli %3, %7 : vector<8x128xi32>
    %9 = arith.addi %8, %4 : vector<8x128xi32>
    %10 = vector.broadcast %6 : i32 to vector<8x128xi32>
    %11 = arith.xori %9, %10 : vector<8x128xi32>
    %c16_i32 = arith.constant 16 : i32
    %12 = vector.broadcast %c16_i32 : i32 to vector<8x128xi32>
    %13 = arith.shrui %11, %12 : vector<8x128xi32>
    %14 = arith.xori %11, %13 : vector<8x128xi32>
    %c2146121005_i32 = arith.constant 2146121005 : i32
    %15 = vector.broadcast %c2146121005_i32 : i32 to vector<8x128xi32>
    %16 = arith.muli %14, %15 : vector<8x128xi32>
    %c15_i32 = arith.constant 15 : i32
    %17 = vector.broadcast %c15_i32 : i32 to vector<8x128xi32>
    %18 = arith.shrui %16, %17 : vector<8x128xi32>
    %19 = arith.xori %16, %18 : vector<8x128xi32>
    %c-2073254261_i32 = arith.constant -2073254261 : i32
    %20 = vector.broadcast %c-2073254261_i32 : i32 to vector<8x128xi32>
    %21 = arith.muli %19, %20 : vector<8x128xi32>
    %c16_i32_0 = arith.constant 16 : i32
    %22 = vector.broadcast %c16_i32_0 : i32 to vector<8x128xi32>
    %23 = arith.shrui %21, %22 : vector<8x128xi32>
    %24 = arith.xori %21, %23 : vector<8x128xi32>
    %c8_i32_1 = arith.constant 8 : i32
    %25 = vector.broadcast %c8_i32_1 : i32 to vector<8x128xi32>
    %26 = arith.shrui %24, %25 : vector<8x128xi32>
    %c0_2 = arith.constant 0 : index
    %c0_3 = arith.constant 0 : index
    %27 = vector.load %arg3[%c0_2, %c0_3] : memref<1x128xi32, #tpu.memory_space<vmem>>, vector<1x128xi32>
    %28 = vector.broadcast %27 : vector<1x128xi32> to vector<8x128xi32>
    %29 = arith.cmpi slt, %26, %28 : vector<8x128xi32>
    %30 = arith.extui %29 : vector<8x128xi1> to vector<8x128xi32>
    %31 = arith.sitofp %30 : vector<8x128xi32> to vector<8x128xf32>
    %cst = arith.constant dense<0.000000e+00> : vector<8xf32>
    %32 = vector.multi_reduction <add>, %31, %cst [1] : vector<8x128xf32> to vector<8xf32>
    %33 = vector.shape_cast %32 : vector<8xf32> to vector<8x1xf32>
    %cst_4 = arith.constant 0.000000e+00 : f32
    %34 = vector.broadcast %cst_4 : f32 to vector<8x1xf32>
    %35 = arith.cmpf oeq, %33, %34 : vector<8x1xf32>
    %cst_5 = arith.constant 3.200000e+01 : f32
    %36 = vector.broadcast %cst_5 : f32 to vector<8x1xf32>
    %37 = arith.divf %36, %33 : vector<8x1xf32>
    %cst_6 = arith.constant -1.000000e+00 : f32
    %38 = vector.broadcast %cst_6 : f32 to vector<8x1xf32>
    %39 = arith.select %35, %38, %37 : vector<8x1xi1>, vector<8x1xf32>
    %c0_7 = arith.constant 0 : index
    %c0_8 = arith.constant 0 : index
    %40 = vector.load %arg2[%c0_7, %c0_8] : memref<8x128xf32, #tpu.memory_space<vmem>>, vector<8x128xf32>
    %41 = vector.broadcast %39 : vector<8x1xf32> to vector<8x128xf32>
    %42 = arith.mulf %40, %41 : vector<8x128xf32>
    %cst_9 = arith.constant 0.000000e+00 : f32
    %43 = vector.broadcast %cst_9 : f32 to vector<8x128xf32>
    %44 = arith.select %29, %42, %43 : vector<8x128xi1>, vector<8x128xf32>
    %c0_10 = arith.constant 0 : index
    %c0_11 = arith.constant 0 : index
    %45 = vector.load %arg4[%c0_10, %c0_11] : memref<8x128xf32, #tpu.memory_space<vmem>>, vector<8x128xf32>
    tpu.vector_store %arg4[%c0_10, %c0_11], %44 {strides = array<i32>} : memref<8x128xf32, #tpu.memory_space<vmem>>, vector<8x128xf32>,
    return
  }
  func.func @transform_0(%arg0: i32, %arg1: memref<1xi32, #tpu.memory_space<smem>>) -> (i32, i32) {
    %c0_i32 = arith.constant 0 : i32
    %c0_i32_0 = arith.constant 0 : i32
    return %arg0, %c0_i32 : i32, i32
  }
  func.func @transform_1(%arg0: i32, %arg1: memref<1xi32, #tpu.memory_space<smem>>) -> (i32, i32) {
    %c0_i32 = arith.constant 0 : i32
    %c0_i32_0 = arith.constant 0 : i32
    %c0_i32_1 = arith.constant 0 : i32
    return %c0_i32, %c0_i32_0 : i32, i32
  }
  func.func @transform_2(%arg0: i32, %arg1: memref<1xi32, #tpu.memory_space<smem>>) -> (i32, i32) {
    %c0_i32 = arith.constant 0 : i32
    %c0_i32_0 = arith.constant 0 : i32
    return %arg0, %c0_i32 : i32, i32
  }
}

</mosaic_0001>

<llo_original>
// kernel: tpu_custom_call.1
$region0: #{tpu_custom_call.1}
  #allocation0 [shape = 'u32[]', space=smem, size = 0x4, offset = 0x4, fixed_abs, tag = 'smem constant byte address 0x4 - core index']
  #allocation1 [shape = 'u32[144,128]{1,0:T(1,128)}', space=vmem, size = 0x12000, scoped, tag = 'internal scratch']
  #allocation2 [shape = 's32[1]{0}', space=sflag, size = 0x4, scoped, tag = 'scoped memory for tpu_custom_call.1']
  #allocation3 [shape = 's32[1]{0:T(128)S(6)}', space=smem, size = 0x200, scoped, tag = 'prefetched SMEM operand 0']
  %s0 = inlined_call_operand.<no memory space> [shape: s32[1], index: 0, kind: input, shape index: {}]
  %s1 = inlined_call_operand.hbm [shape: f32[8,128], index: 1, kind: input, shape index: {}]
  %s2 = inlined_call_operand.vmem [shape: s32[1,128], index: 2, kind: input, shape index: {}]
  %s3 = inlined_call_operand.hbm [shape: f32[8,128], index: 3, kind: output, shape index: {}]
  %s4 = sld [smem:[#allocation0]]
  $region22: #{tpu_custom_call.1} parent=0
    _
  %s6 = ssub.s32 1, %s4
  %s7 = scalar_select 0, %s6, %s4
  %8 = sst [smem:[#allocation3]] %s0
  $region1: #{tpu_custom_call.1} parent=0
    #allocation4 [shape = 'u8[4096]{0}', space=vmem, size = 0x1000, scoped, tag = 'input window, operand 1, single buffered']
    #allocation5 [shape = 's32[1]{0}', space=sflag, size = 0x4, scoped, tag = 'scoped memory for tpu_custom_call.1']
    #allocation6 [shape = 's32[1]{0}', space=sflag, size = 0x4, scoped, tag = 'scoped memory for tpu_custom_call.1']
    #allocation7 [shape = 'u8[4096]{0}', space=vmem, size = 0x1000, scoped, tag = 'output window, operand 0, single buffered']
    %9 = vsyncpa [#allocation5], 0
    %10 = vsyncpa [#allocation6], 0
    // Predicated region
    $region2: #{tpu_custom_call.1} parent=1 // pred_check
      _
    $region3: #{tpu_custom_call.1} parent=1 // pred_check_branch
      %12 = sbr.rel (0) target = $region5
    $region4: #{tpu_custom_call.1} parent=1 // pred_region
      %s14 = ssub.s32 128, 128
      %15 = vsyncadd [#allocation5], %s14
      %s17 = sshll.u32 [#allocation4], 4
      %s18 = int_to_ptr.vmem [resolvable:$true] %s17
      %20 = dma.hbm_to_vmem [thread:$0]  %s1, 128, %s18, [#allocation5]
    $region5: #{tpu_custom_call.1} parent=1 // pred_fallthru
      _
    // Predicated region
    $region6: #{tpu_custom_call.1} parent=1 // pred_check
      _
    $region7: #{tpu_custom_call.1} parent=1 // pred_check_branch
      %22 = sbr.rel (0) target = $region9
    $region8: #{tpu_custom_call.1} parent=1 // pred_region
      _
    $region9: #{tpu_custom_call.1} parent=1 // pred_fallthru
      _
    // Predicated region
    $region10: #{tpu_custom_call.1} parent=1 // pred_check
      _
    $region11: #{tpu_custom_call.1} parent=1 // pred_check_branch
      %24 = sbr.rel (0) target = $region13
    $region12: #{tpu_custom_call.1} parent=1 // pred_region
      %25 = dma.done [#allocation5], 128
    $region13: #{tpu_custom_call.1} parent=1 // pred_fallthru
      _
    %v26 = vlaneseq
    %v27 = vshrl.u32 %v26, 7
    %s28 = smul.u32 0, 8
    %v29 = vstv %s28
    %v30 = vadd.s32 %v27, %v29
    %v31 = vlaneseq
    %v32 = vand.u32 %v31, 127
    %s33 = sld [smem:[#allocation3]]
    %s34 = smul.u32 %s33, 2654435769
    %v35 = vmul.u32 %v30, 128
    %v36 = vadd.s32 %v35, %v32
    %v37 = vstv %s34
    %v38 = vxor.u32 %v36, %v37
    %v39 = vshrl.u32 %v38, 16
    %v40 = vxor.u32 %v38, %v39
    %v41 = vmul.u32 %v40, 2146121005
    %v42 = vshrl.u32 %v41, 15
    %v43 = vxor.u32 %v41, %v42
    %v44 = vmul.u32 %v43, 2221713035
    %v45 = vshrl.u32 %v44, 16
    %v46 = vxor.u32 %v44, %v45
    %v47 = vshrl.u32 %v46, 8
    %v48 = vld [vmem:[%s2] sm:$0x1]
    %v49 = vlaneseq
    %v50 = vshrl.u32 %v49, 7
    %v51 = vsub.s32 0, %v50
    %v52 = vrot.slane %v48, %v51
    %vm53 = vcmp.lt.s32.totalorder %v47, %v52
    %v54 = vsel %vm53, 1, 0
    %v55 = vcvt.s32.f32 %v54
    %56 = vadd.xlane.f32.xlu0 %v55
    %v57 = vpop.xlane.xlu0 %56
    %vm58 = vcmp.eq.f32.partialorder %v57, 0.0
    %v59 = vrcp.pop %v57
    %v60 = vmul.f32 32.0, %v59
    %v61 = vsel %vm58, -1.0, %v60
    %v62 = vld [vmem:[#allocation4] sm:$0xff]
    %v63 = vmul.f32 %v62, %v61
    %v64 = vsel %vm53, %v63, 0.0
    %65 = vst [vmem:[#allocation7] sm:$0xff] %v64
    // Predicated region
    $region14: #{tpu_custom_call.1} parent=1 // pred_check
      _
    $region15: #{tpu_custom_call.1} parent=1 // pred_check_branch
      %67 = sbr.rel (0) target = $region17
    $region16: #{tpu_custom_call.1} parent=1 // pred_region
      %s69 = ssub.s32 128, 128
      %70 = vsyncadd [#allocation6], %s69
      %s72 = sshll.u32 [#allocation7], 4
      %s73 = int_to_ptr.vmem [resolvable:$true] %s72
      %75 = dma.vmem_to_hbm [thread:$0]  %s73, 128, %s3, [#allocation6]
    $region17: #{tpu_custom_call.1} parent=1 // pred_fallthru
      _
    // Predicated region
    $region18: #{tpu_custom_call.1} parent=1 // pred_check
      _
    $region19: #{tpu_custom_call.1} parent=1 // pred_check_branch
      %77 = sbr.rel (0) target = $region21
    $region20: #{tpu_custom_call.1} parent=1 // pred_region
      %78 = dma.done [#allocation6], 128
    $region21: #{tpu_custom_call.1} parent=1 // pred_fallthru
      _
    %79 = vsyncpa [#allocation5], 1
    %80 = vsyncpa [#allocation6], 1

</llo_original>
